<compile_context>
chip_gen: v7x
topology: tpu7x:2x2x1
jax: 0.10.0
libtpu: 0.0.40
codegen_flags: <defaults>
</compile_context>

<pallas_src>
import jax
import jax.numpy as jnp
from jax import lax
from jax.experimental import pallas as pl
from jax.experimental.pallas import tpu as pltpu


def nsb2_kernel(x_ref, w_ref, b_ref, o_ref):
    # x: (N, in_f), w: (in_f, out_f) (pre-transposed at prep), b: (1, out_f).
    logits = jnp.dot(
        x_ref[...], w_ref[...],
        preferred_element_type=jnp.float32,
        precision=lax.Precision.HIGHEST,
    ) + b_ref[...]

    # Softmax over dim=0 (batch axis), numerically stable; columns independent.
    m = jnp.max(logits, axis=0, keepdims=True)
    e = jnp.exp(logits - m)
    s = jnp.sum(e, axis=0, keepdims=True)
    o_ref[...] = (e * pl.reciprocal(s, approx=False)).astype(o_ref.dtype)


def nsb2_prepare_params(weight, bias):
    """One-time (hoisted) parameter prep.
    weight: (out_f, in_f) PyTorch nn.Linear layout; bias: (out_f,).
    Pre-transpose to (in_f, out_f) so the kernel's contraction is the natural
    weight-stationary (M,K)x(K,N) MXU form with no per-call relayout."""
    w_t = jnp.transpose(weight)            # (in_f, out_f)
    b_row = jnp.reshape(bias, (1, -1))     # (1, out_f)
    return w_t, b_row


def nsb2_forward(x, w_t, b_row):
    """x: (N, in_f); w_t: (in_f, out_f); b_row: (1, out_f) -> (N, out_f)."""
    n = x.shape[0]
    out_f = w_t.shape[1]
    vmem = pl.BlockSpec(memory_space=pltpu.MemorySpace.VMEM)
    return pl.pallas_call(
        nsb2_kernel,
        out_shape=jax.ShapeDtypeStruct((n, out_f), x.dtype),
        in_specs=[vmem, vmem, vmem],
        out_specs=vmem,
    )(x, w_t, b_row)


if __name__ == "__main__":
    key = jax.random.PRNGKey(0)
    k_x, k_w, k_b = jax.random.split(key, 3)

    # Small shapes consistent with the module: batch=8, input_size2=32, output_size2=16
    N, IN_F, OUT_F = 8, 32, 16

    x = jax.random.normal(k_x, (N, IN_F), dtype=jnp.float32)

    # Deterministic nn.Linear-style init: U(-1/sqrt(in), 1/sqrt(in))
    bound = 1.0 / (IN_F ** 0.5)
    weight = jax.random.uniform(k_w, (OUT_F, IN_F), minval=-bound, maxval=bound,
                                dtype=jnp.float32)
    bias = jax.random.uniform(k_b, (OUT_F,), minval=-bound, maxval=bound,
                              dtype=jnp.float32)

    # Hoisted, one-time parameter preparation (NOT in the per-call hot path).
    w_t, b_row = nsb2_prepare_params(weight, bias)

    out = nsb2_forward(x, w_t, b_row)
    out = jax.block_until_ready(out)

    # Cross-check against plain-JAX reference (exact reciprocal + HIGHEST precision
    # dot -> tight tolerance).
    ref = jax.nn.softmax(x @ weight.T + bias, axis=0)
    assert out.shape == (N, OUT_F)
    assert jnp.allclose(out, ref, atol=1e-5, rtol=1e-5)

    print("KERNEL_OK")
</pallas_src>

<mosaic_0001>
module attributes {stable_mosaic.version = 11 : i64} {
  func.func @nsb2_kernel(%arg0: memref<8x32xf32, #tpu.memory_space<vmem>>, %arg1: memref<32x16xf32, #tpu.memory_space<vmem>>, %arg2: memref<1x16xf32, #tpu.memory_space<vmem>>, %arg3: memref<8x16xf32, #tpu.memory_space<vmem>>) attributes {dimension_semantics = [], scalar_prefetch = 0 : i64, scratch_operands = 0 : i64, tpu.core_type = #tpu.core_type<tc>} {
    %c0 = arith.constant 0 : index
    %c0_0 = arith.constant 0 : index
    %0 = vector.load %arg0[%c0, %c0_0] : memref<8x32xf32, #tpu.memory_space<vmem>>, vector<8x32xf32>
    %c0_1 = arith.constant 0 : index
    %c0_2 = arith.constant 0 : index
    %1 = vector.load %arg1[%c0_1, %c0_2] : memref<32x16xf32, #tpu.memory_space<vmem>>, vector<32x16xf32>
    %cst = arith.constant dense<0.000000e+00> : vector<8x16xf32>
    %2 = tpu.matmul %0, %1, %cst {dimension_numbers = #tpu.dot_dimension_numbers<[1], [0], [0], [1], [0, 0, 1, 1], [], []>, precision = #tpu.contract_precision<fp32>} : vector<8x32xf32>, vector<32x16xf32>, vector<8x16xf32> -> vector<8x16xf32>
    %c0_3 = arith.constant 0 : index
    %c0_4 = arith.constant 0 : index
    %3 = vector.load %arg2[%c0_3, %c0_4] : memref<1x16xf32, #tpu.memory_space<vmem>>, vector<1x16xf32>
    %4 = vector.broadcast %3 : vector<1x16xf32> to vector<8x16xf32>
    %5 = arith.addf %2, %4 : vector<8x16xf32>
    %cst_5 = arith.constant dense<0xFF800000> : vector<16xf32>
    %6 = vector.multi_reduction <maximumf>, %5, %cst_5 [0] : vector<8x16xf32> to vector<16xf32>
    %7 = vector.shape_cast %6 : vector<16xf32> to vector<1x16xf32>
    %8 = vector.broadcast %7 : vector<1x16xf32> to vector<8x16xf32>
    %9 = arith.subf %5, %8 : vector<8x16xf32>
    %10 = math.exp %9 : vector<8x16xf32>
    %cst_6 = arith.constant dense<0.000000e+00> : vector<16xf32>
    %11 = vector.multi_reduction <add>, %10, %cst_6 [0] : vector<8x16xf32> to vector<16xf32>
    %12 = vector.shape_cast %11 : vector<16xf32> to vector<1x16xf32>
    %13 = tpu.reciprocal %12 : vector<1x16xf32> -> vector<1x16xf32>
    %14 = vector.broadcast %13 : vector<1x16xf32> to vector<8x16xf32>
    %15 = arith.mulf %10, %14 : vector<8x16xf32>
    %c0_7 = arith.constant 0 : index
    %c0_8 = arith.constant 0 : index
    %16 = vector.load %arg3[%c0_7, %c0_8] : memref<8x16xf32, #tpu.memory_space<vmem>>, vector<8x16xf32>
    tpu.vector_store %arg3[%c0_7, %c0_8], %15 {strides = array<i32>} : memref<8x16xf32, #tpu.memory_space<vmem>>, vector<8x16xf32>,
    return
  }
}

</mosaic_0001>

<llo_original>
// kernel: tpu_custom_call.1
$region0: #{tpu_custom_call.1}
  #allocation0 [shape = 'u32[]', space=smem, size = 0x4, offset = 0x4, fixed_abs, tag = 'smem constant byte address 0x4 - core index']
  #allocation1 [shape = 'u32[144,128]{1,0:T(1,128)}', space=vmem, size = 0x12000, scoped, tag = 'internal scratch']
  %s0 = inlined_call_operand.vmem [shape: f32[8,32], index: 0, kind: input, shape index: {}]
  %s1 = inlined_call_operand.vmem [shape: f32[32,16], index: 1, kind: input, shape index: {}]
  %s2 = inlined_call_operand.vmem [shape: f32[1,16], index: 2, kind: input, shape index: {}]
  %s3 = inlined_call_operand.hbm [shape: f32[8,16], index: 3, kind: output, shape index: {}]
  %s4 = sld [smem:[#allocation0]]
  $region22: #{tpu_custom_call.1} parent=0
    _
  %s6 = ssub.s32 1, %s4
  %s7 = scalar_select 0, %s6, %s4
  $region1: #{tpu_custom_call.1} parent=0
    #allocation2 [shape = 'u8[4096]{0}', space=vmem, size = 0x1000, scoped, tag = 'output window, operand 0, single buffered']
    #allocation3 [shape = 's32[1]{0}', space=sflag, size = 0x4, scoped, tag = 'scoped memory for tpu_custom_call.1']
    %8 = vsyncpa [#allocation3], 0
    // Predicated region
    $region2: #{tpu_custom_call.1} parent=1 // pred_check
      _
    $region3: #{tpu_custom_call.1} parent=1 // pred_check_branch
      %10 = sbr.rel (0) target = $region5
    $region4: #{tpu_custom_call.1} parent=1 // pred_region
      _
    $region5: #{tpu_custom_call.1} parent=1 // pred_fallthru
      _
    // Predicated region
    $region6: #{tpu_custom_call.1} parent=1 // pred_check
      _
    $region7: #{tpu_custom_call.1} parent=1 // pred_check_branch
      %12 = sbr.rel (0) target = $region9
    $region8: #{tpu_custom_call.1} parent=1 // pred_region
      _
    $region9: #{tpu_custom_call.1} parent=1 // pred_fallthru
      _
    // Predicated region
    $region10: #{tpu_custom_call.1} parent=1 // pred_check
      _
    $region11: #{tpu_custom_call.1} parent=1 // pred_check_branch
      %14 = sbr.rel (0) target = $region13
    $region12: #{tpu_custom_call.1} parent=1 // pred_region
      _
    $region13: #{tpu_custom_call.1} parent=1 // pred_fallthru
      _
    %v15 = vld [vmem:[%s0] sm:$0xff]
    %v16 = vld [vmem:[%s1] sm:$0xff]
    %v17 = vld [vmem:[%s1 + $0x8] sm:$0xff]
    %v18 = vld [vmem:[%s1 + $0x10] sm:$0xff]
    %v19 = vld [vmem:[%s1 + $0x18] sm:$0xff]
    %v20 = vld [vmem:[%s2] sm:$0x1]
    %v22 = vlaneseq
    %v23 = vshrl.u32 %v22, 7
    %v24 = vsub.s32 0, %v23
    %v25 = vrot.slane %v20, %v24
    %vm27 = vcmask 261120
    %v29 = vsel %vm27, %v15, 0
    %31 = vmatprep.subr.mxu0 0.0
    %v32 = vand.u32 %v16, 4294901760
    %33 = vmatpush1.msra.mxu0 %v32
    %34 = vmatprep.subr.mxu0 0.0
    %v35 = vand.u32 %v17, 4294901760
    %36 = vmatpush1.msra.mxu0 %v35
    %37 = vmatprep.subr.mxu0 0.0
    %v38 = vand.u32 %v18, 4294901760
    %39 = vmatpush1.msra.mxu0 %v38
    %40 = vmatprep.subr.mxu0 0.0
    %v41 = vand.u32 %v19, 4294901760
    %42 = vmatpush1.msra.mxu0 %v41
    %43 = vmatprep.subr.mxu0 0.0
    %44 = vmatpush1.msra.mxu0 0.0
    %45 = vmatprep.subr.mxu0 0.0
    %46 = vmatpush1.msra.mxu0 0.0
    %47 = vmatprep.subr.mxu0 0.0
    %48 = vmatpush1.msra.mxu0 0.0
    %49 = vmatprep.subr.mxu0 0.0
    %50 = vmatpush1.msra.mxu0 0.0
    %51 = vmatprep.subr.mxu0 0.0
    %52 = vmatpush1.msra.mxu0 0.0
    %53 = vmatprep.subr.mxu0 0.0
    %54 = vmatpush1.msra.mxu0 0.0
    %55 = vmatprep.subr.mxu0 0.0
    %56 = vmatpush1.msra.mxu0 0.0
    %57 = vmatprep.subr.mxu0 0.0
    %58 = vmatpush1.msra.mxu0 0.0
    %59 = vmatprep.subr.mxu0 0.0
    %60 = vmatpush1.msra.mxu0 0.0
    %61 = vmatprep.subr.mxu0 0.0
    %62 = vmatpush1.msra.mxu0 0.0
    %63 = vmatprep.subr.mxu0 0.0
    %64 = vmatpush1.msra.mxu0 0.0
    %65 = vmatprep.subr.mxu0 0.0
    %66 = vmatpush1.msra.mxu0 0.0
    %67 = vmatprep.subr.mxu0 0.0
    %68 = vmatpush1.msra.mxu0 0.0
    %69 = vmatprep.subr.mxu0 0.0
    %70 = vmatpush1.msra.mxu0 0.0
    %71 = vmatprep.subr.mxu0 0.0
    %72 = vmatpush1.msra.mxu0 0.0
    %73 = vmatprep.subr.mxu0 0.0
    %74 = vmatpush1.msra.mxu0 0.0
    %75 = vmatprep.subr.mxu0 0.0
    %76 = vmatpush1.msra.mxu0 0.0
    %77 = vmatprep.subr.mxu0 0.0
    %78 = vmatpush1.msra.mxu0 0.0
    %79 = vmatprep.subr.mxu0 0.0
    %80 = vmatpush1.msra.mxu0 0.0
    %81 = vmatprep.subr.mxu0 0.0
    %82 = vmatpush1.msra.mxu0 0.0
    %83 = vmatprep.subr.mxu0 0.0
    %84 = vmatpush1.msra.mxu0 0.0
    %85 = vmatprep.subr.mxu0 0.0
    %86 = vmatpush1.msra.mxu0 0.0
    %87 = vmatprep.subr.mxu0 0.0
    %88 = vmatpush1.msra.mxu0 0.0
    %89 = vmatprep.subr.mxu0 0.0
    %90 = vmatpush1.msra.mxu0 0.0
    %91 = vmatprep.subr.mxu0 0.0
    %92 = vmatpush1.msra.mxu0 0.0
    %93 = vmatprep.subr.mxu0 0.0
    %94 = vmatpush1.msra.mxu0 0.0
    %95 = vmatprep.subr.mxu0 0.0
    %96 = vmatpush1.msra.mxu0 0.0
    %97 = vmatprep.subr.mxu0 0.0
    %98 = vmatpush1.msra.mxu0 0.0
    %99 = vmatprep.mubr.f32.mxu0 0.0
    %v100 = vand.u32 %v29, 4294901760
    %v101 = vsub.f32 %v29, %v100
    %v102 = vand.u32 %v101, 4294901760
    %v103 = vsub.f32 %v101, %v102
    %v104 = vand.u32 %v103, 4294901760
    %105 = vmatmul.mubr.f32.gmra.mrb[0].mxu0 %v104
    %v106 = vpop.f32.mrb[0].mxu0
    %v107 = vadd.f32 %v25, %v106
    %v108 = vpop.f32.mrb[0].mxu0
    %109 = vdwg.mxu0
    %110 = vmatprep.subr.mxu0 0.0
    %v111 = vand.u32 %v16, 4294901760
    %v112 = vsub.f32 %v16, %v111
    %v113 = vand.u32 %v112, 4294901760
    %v114 = vsub.f32 %v112, %v113
    %v115 = vand.u32 %v114, 4294901760
    %116 = vmatpush1.msra.mxu0 %v115
    %117 = vmatprep.subr.mxu0 0.0
    %v118 = vand.u32 %v17, 4294901760
    %v119 = vsub.f32 %v17, %v118
    %v120 = vand.u32 %v119, 4294901760
    %v121 = vsub.f32 %v119, %v120
    %v122 = vand.u32 %v121, 4294901760
    %123 = vmatpush1.msra.mxu0 %v122
    %124 = vmatprep.subr.mxu0 0.0
    %v125 = vand.u32 %v18, 4294901760
    %v126 = vsub.f32 %v18, %v125
    %v127 = vand.u32 %v126, 4294901760
    %v128 = vsub.f32 %v126, %v127
    %v129 = vand.u32 %v128, 4294901760
    %130 = vmatpush1.msra.mxu0 %v129
    %131 = vmatprep.subr.mxu0 0.0
    %v132 = vand.u32 %v19, 4294901760
    %v133 = vsub.f32 %v19, %v132
    %v134 = vand.u32 %v133, 4294901760
    %v135 = vsub.f32 %v133, %v134
    %v136 = vand.u32 %v135, 4294901760
    %137 = vmatpush1.msra.mxu0 %v136
    %138 = vmatprep.subr.mxu0 0.0
    %139 = vmatpush1.msra.mxu0 0.0
    %140 = vmatprep.subr.mxu0 0.0
    %141 = vmatpush1.msra.mxu0 0.0
    %142 = vmatprep.subr.mxu0 0.0
    %143 = vmatpush1.msra.mxu0 0.0
    %144 = vmatprep.subr.mxu0 0.0
    %145 = vmatpush1.msra.mxu0 0.0
    %146 = vmatprep.subr.mxu0 0.0
    %147 = vmatpush1.msra.mxu0 0.0
    %148 = vmatprep.subr.mxu0 0.0
    %149 = vmatpush1.msra.mxu0 0.0
    %150 = vmatprep.subr.mxu0 0.0
    %151 = vmatpush1.msra.mxu0 0.0
    %152 = vmatprep.subr.mxu0 0.0
    %153 = vmatpush1.msra.mxu0 0.0
    %154 = vmatprep.subr.mxu0 0.0
    %155 = vmatpush1.msra.mxu0 0.0
    %156 = vmatprep.subr.mxu0 0.0
    %157 = vmatpush1.msra.mxu0 0.0
    %158 = vmatprep.subr.mxu0 0.0
    %159 = vmatpush1.msra.mxu0 0.0
    %160 = vmatprep.subr.mxu0 0.0
    %161 = vmatpush1.msra.mxu0 0.0
    %162 = vmatprep.subr.mxu0 0.0
    %163 = vmatpush1.msra.mxu0 0.0
    %164 = vmatprep.subr.mxu0 0.0
    %165 = vmatpush1.msra.mxu0 0.0
    %166 = vmatprep.subr.mxu0 0.0
    %167 = vmatpush1.msra.mxu0 0.0
    %168 = vmatprep.subr.mxu0 0.0
    %169 = vmatpush1.msra.mxu0 0.0
    %170 = vmatprep.subr.mxu0 0.0
    %171 = vmatpush1.msra.mxu0 0.0
    %172 = vmatprep.subr.mxu0 0.0
    %173 = vmatpush1.msra.mxu0 0.0
    %174 = vmatprep.subr.mxu0 0.0
    %175 = vmatpush1.msra.mxu0 0.0
    %176 = vmatprep.subr.mxu0 0.0
    %177 = vmatpush1.msra.mxu0 0.0
    %178 = vmatprep.subr.mxu0 0.0
    %179 = vmatpush1.msra.mxu0 0.0
    %180 = vmatprep.subr.mxu0 0.0
    %181 = vmatpush1.msra.mxu0 0.0
    %182 = vmatprep.subr.mxu0 0.0
    %183 = vmatpush1.msra.mxu0 0.0
    %184 = vmatprep.subr.mxu0 0.0
    %185 = vmatpush1.msra.mxu0 0.0
    %186 = vmatprep.subr.mxu0 0.0
    %187 = vmatpush1.msra.mxu0 0.0
    %188 = vmatprep.subr.mxu0 0.0
    %189 = vmatpush1.msra.mxu0 0.0
    %190 = vmatprep.subr.mxu0 0.0
    %191 = vmatpush1.msra.mxu0 0.0
    %192 = vmatprep.subr.mxu0 0.0
    %193 = vmatpush1.msra.mxu0 0.0
    %194 = vmatprep.mubr.f32.mxu0 0.0
    %v195 = vand.u32 %v29, 4294901760
    %196 = vmatmul.mubr.f32.gmra.mrb[0].mxu0 %v195
    %v197 = vpop.f32.mrb[0].mxu0
    %v198 = vadd.f32 %v107, %v197
    %v199 = vpop.f32.mrb[0].mxu0
    %200 = vdwg.mxu0
    %201 = vmatprep.subr.mxu0 0.0
    %v202 = vand.u32 %v16, 4294901760
    %v203 = vsub.f32 %v16, %v202
    %204 = vmatpush1.msra.mxu0 %v203
    %205 = vmatprep.subr.mxu0 0.0
    %v206 = vand.u32 %v17, 4294901760
    %v207 = vsub.f32 %v17, %v206
    %208 = vmatpush1.msra.mxu0 %v207
    %209 = vmatprep.subr.mxu0 0.0
    %v210 = vand.u32 %v18, 4294901760
    %v211 = vsub.f32 %v18, %v210
    %212 = vmatpush1.msra.mxu0 %v211
    %213 = vmatprep.subr.mxu0 0.0
    %v214 = vand.u32 %v19, 4294901760
    %v215 = vsub.f32 %v19, %v214
    %216 = vmatpush1.msra.mxu0 %v215
    %217 = vmatprep.subr.mxu0 0.0
    %218 = vmatpush1.msra.mxu0 0.0
    %219 = vmatprep.subr.mxu0 0.0
    %220 = vmatpush1.msra.mxu0 0.0
    %221 = vmatprep.subr.mxu0 0.0
    %222 = vmatpush1.msra.mxu0 0.0
    %223 = vmatprep.subr.mxu0 0.0
    %224 = vmatpush1.msra.mxu0 0.0
    %225 = vmatprep.subr.mxu0 0.0
    %226 = vmatpush1.msra.mxu0 0.0
    %227 = vmatprep.subr.mxu0 0.0
    %228 = vmatpush1.msra.mxu0 0.0
    %229 = vmatprep.subr.mxu0 0.0
    %230 = vmatpush1.msra.mxu0 0.0
    %231 = vmatprep.subr.mxu0 0.0
    %232 = vmatpush1.msra.mxu0 0.0
    %233 = vmatprep.subr.mxu0 0.0
    %234 = vmatpush1.msra.mxu0 0.0
    %235 = vmatprep.subr.mxu0 0.0
    %236 = vmatpush1.msra.mxu0 0.0
    %237 = vmatprep.subr.mxu0 0.0
    %238 = vmatpush1.msra.mxu0 0.0
    %239 = vmatprep.subr.mxu0 0.0
    %240 = vmatpush1.msra.mxu0 0.0
    %241 = vmatprep.subr.mxu0 0.0
    %242 = vmatpush1.msra.mxu0 0.0
    %243 = vmatprep.subr.mxu0 0.0
    %244 = vmatpush1.msra.mxu0 0.0
    %245 = vmatprep.subr.mxu0 0.0
    %246 = vmatpush1.msra.mxu0 0.0
    %247 = vmatprep.subr.mxu0 0.0
    %248 = vmatpush1.msra.mxu0 0.0
    %249 = vmatprep.subr.mxu0 0.0
    %250 = vmatpush1.msra.mxu0 0.0
    %251 = vmatprep.subr.mxu0 0.0
    %252 = vmatpush1.msra.mxu0 0.0
    %253 = vmatprep.subr.mxu0 0.0
    %254 = vmatpush1.msra.mxu0 0.0
    %255 = vmatprep.subr.mxu0 0.0
    %256 = vmatpush1.msra.mxu0 0.0
    %257 = vmatprep.subr.mxu0 0.0
    %258 = vmatpush1.msra.mxu0 0.0
    %259 = vmatprep.subr.mxu0 0.0
    %260 = vmatpush1.msra.mxu0 0.0
    %261 = vmatprep.subr.mxu0 0.0
    %262 = vmatpush1.msra.mxu0 0.0
    %263 = vmatprep.subr.mxu0 0.0
    %264 = vmatpush1.msra.mxu0 0.0
    %265 = vmatprep.subr.mxu0 0.0
    %266 = vmatpush1.msra.mxu0 0.0
    %267 = vmatprep.subr.mxu0 0.0
    %268 = vmatpush1.msra.mxu0 0.0
    %269 = vmatprep.subr.mxu0 0.0
    %270 = vmatpush1.msra.mxu0 0.0
    %271 = vmatprep.subr.mxu0 0.0
    %272 = vmatpush1.msra.mxu0 0.0
    %273 = vmatprep.mubr.f32.mxu0 0.0
    %v274 = vand.u32 %v29, 4294901760
    %v275 = vsub.f32 %v29, %v274
    %276 = vmatmul.mubr.f32.gmra.mrb[0].mxu0 %v275
    %v277 = vpop.f32.mrb[0].mxu0
    %v278 = vadd.f32 %v198, %v277
    %v279 = vpop.f32.mrb[0].mxu0
    %280 = vdwg.mxu0
    %281 = vmatprep.subr.mxu0 0.0
    %v282 = vand.u32 %v16, 4294901760
    %283 = vmatpush1.msra.mxu0 %v282
    %284 = vmatprep.subr.mxu0 0.0
    %v285 = vand.u32 %v17, 4294901760
    %286 = vmatpush1.msra.mxu0 %v285
    %287 = vmatprep.subr.mxu0 0.0
    %v288 = vand.u32 %v18, 4294901760
    %289 = vmatpush1.msra.mxu0 %v288
    %290 = vmatprep.subr.mxu0 0.0
    %v291 = vand.u32 %v19, 4294901760
    %292 = vmatpush1.msra.mxu0 %v291
    %293 = vmatprep.subr.mxu0 0.0
    %294 = vmatpush1.msra.mxu0 0.0
    %295 = vmatprep.subr.mxu0 0.0
    %296 = vmatpush1.msra.mxu0 0.0
    %297 = vmatprep.subr.mxu0 0.0
    %298 = vmatpush1.msra.mxu0 0.0
    %299 = vmatprep.subr.mxu0 0.0
    %300 = vmatpush1.msra.mxu0 0.0
    %301 = vmatprep.subr.mxu0 0.0
    %302 = vmatpush1.msra.mxu0 0.0
    %303 = vmatprep.subr.mxu0 0.0
    %304 = vmatpush1.msra.mxu0 0.0
    %305 = vmatprep.subr.mxu0 0.0
    %306 = vmatpush1.msra.mxu0 0.0
    %307 = vmatprep.subr.mxu0 0.0
    %308 = vmatpush1.msra.mxu0 0.0
    %309 = vmatprep.subr.mxu0 0.0
    %310 = vmatpush1.msra.mxu0 0.0
    %311 = vmatprep.subr.mxu0 0.0
    %312 = vmatpush1.msra.mxu0 0.0
    %313 = vmatprep.subr.mxu0 0.0
    %314 = vmatpush1.msra.mxu0 0.0
    %315 = vmatprep.subr.mxu0 0.0
    %316 = vmatpush1.msra.mxu0 0.0
    %317 = vmatprep.subr.mxu0 0.0
    %318 = vmatpush1.msra.mxu0 0.0
    %319 = vmatprep.subr.mxu0 0.0
    %320 = vmatpush1.msra.mxu0 0.0
    %321 = vmatprep.subr.mxu0 0.0
    %322 = vmatpush1.msra.mxu0 0.0
    %323 = vmatprep.subr.mxu0 0.0
    %324 = vmatpush1.msra.mxu0 0.0
    %325 = vmatprep.subr.mxu0 0.0
    %326 = vmatpush1.msra.mxu0 0.0
    %327 = vmatprep.subr.mxu0 0.0
    %328 = vmatpush1.msra.mxu0 0.0
    %329 = vmatprep.subr.mxu0 0.0
    %330 = vmatpush1.msra.mxu0 0.0
    %331 = vmatprep.subr.mxu0 0.0
    %332 = vmatpush1.msra.mxu0 0.0
    %333 = vmatprep.subr.mxu0 0.0
    %334 = vmatpush1.msra.mxu0 0.0
    %335 = vmatprep.subr.mxu0 0.0
    %336 = vmatpush1.msra.mxu0 0.0
    %337 = vmatprep.subr.mxu0 0.0
    %338 = vmatpush1.msra.mxu0 0.0
    %339 = vmatprep.subr.mxu0 0.0
    %340 = vmatpush1.msra.mxu0 0.0
    %341 = vmatprep.subr.mxu0 0.0
    %342 = vmatpush1.msra.mxu0 0.0
    %343 = vmatprep.subr.mxu0 0.0
    %344 = vmatpush1.msra.mxu0 0.0
    %345 = vmatprep.subr.mxu0 0.0
    %346 = vmatpush1.msra.mxu0 0.0
    %347 = vmatprep.subr.mxu0 0.0
    %348 = vmatpush1.msra.mxu0 0.0
    %349 = vmatprep.mubr.f32.mxu0 0.0
    %v350 = vand.u32 %v29, 4294901760
    %v351 = vsub.f32 %v29, %v350
    %v352 = vand.u32 %v351, 4294901760
    %353 = vmatmul.mubr.f32.gmra.mrb[0].mxu0 %v352
    %v354 = vpop.f32.mrb[0].mxu0
    %v355 = vadd.f32 %v278, %v354
    %v356 = vpop.f32.mrb[0].mxu0
    %357 = vdwg.mxu0
    %358 = vmatprep.subr.mxu0 0.0
    %v359 = vand.u32 %v16, 4294901760
    %v360 = vsub.f32 %v16, %v359
    %v361 = vand.u32 %v360, 4294901760
    %362 = vmatpush1.msra.mxu0 %v361
    %363 = vmatprep.subr.mxu0 0.0
    %v364 = vand.u32 %v17, 4294901760
    %v365 = vsub.f32 %v17, %v364
    %v366 = vand.u32 %v365, 4294901760
    %367 = vmatpush1.msra.mxu0 %v366
    %368 = vmatprep.subr.mxu0 0.0
    %v369 = vand.u32 %v18, 4294901760
    %v370 = vsub.f32 %v18, %v369
    %v371 = vand.u32 %v370, 4294901760
    %372 = vmatpush1.msra.mxu0 %v371
    %373 = vmatprep.subr.mxu0 0.0
    %v374 = vand.u32 %v19, 4294901760
    %v375 = vsub.f32 %v19, %v374
    %v376 = vand.u32 %v375, 4294901760
    %377 = vmatpush1.msra.mxu0 %v376
    %378 = vmatprep.subr.mxu0 0.0
    %379 = vmatpush1.msra.mxu0 0.0
    %380 = vmatprep.subr.mxu0 0.0
    %381 = vmatpush1.msra.mxu0 0.0
    %382 = vmatprep.subr.mxu0 0.0
    %383 = vmatpush1.msra.mxu0 0.0
    %384 = vmatprep.subr.mxu0 0.0
    %385 = vmatpush1.msra.mxu0 0.0
    %386 = vmatprep.subr.mxu0 0.0
    %387 = vmatpush1.msra.mxu0 0.0
    %388 = vmatprep.subr.mxu0 0.0
    %389 = vmatpush1.msra.mxu0 0.0
    %390 = vmatprep.subr.mxu0 0.0
    %391 = vmatpush1.msra.mxu0 0.0
    %392 = vmatprep.subr.mxu0 0.0
    %393 = vmatpush1.msra.mxu0 0.0
    %394 = vmatprep.subr.mxu0 0.0
    %395 = vmatpush1.msra.mxu0 0.0
    %396 = vmatprep.subr.mxu0 0.0
    %397 = vmatpush1.msra.mxu0 0.0
    %398 = vmatprep.subr.mxu0 0.0
    %399 = vmatpush1.msra.mxu0 0.0
    %400 = vmatprep.subr.mxu0 0.0
    %401 = vmatpush1.msra.mxu0 0.0
    %402 = vmatprep.subr.mxu0 0.0
    %403 = vmatpush1.msra.mxu0 0.0
    %404 = vmatprep.subr.mxu0 0.0
    %405 = vmatpush1.msra.mxu0 0.0
    %406 = vmatprep.subr.mxu0 0.0
    %407 = vmatpush1.msra.mxu0 0.0
    %408 = vmatprep.subr.mxu0 0.0
    %409 = vmatpush1.msra.mxu0 0.0
    %410 = vmatprep.subr.mxu0 0.0
    %411 = vmatpush1.msra.mxu0 0.0
    %412 = vmatprep.subr.mxu0 0.0
    %413 = vmatpush1.msra.mxu0 0.0
    %414 = vmatprep.subr.mxu0 0.0
    %415 = vmatpush1.msra.mxu0 0.0
    %416 = vmatprep.subr.mxu0 0.0
    %417 = vmatpush1.msra.mxu0 0.0
    %418 = vmatprep.subr.mxu0 0.0
    %419 = vmatpush1.msra.mxu0 0.0
    %420 = vmatprep.subr.mxu0 0.0
    %421 = vmatpush1.msra.mxu0 0.0
    %422 = vmatprep.subr.mxu0 0.0
    %423 = vmatpush1.msra.mxu0 0.0
    %424 = vmatprep.subr.mxu0 0.0
    %425 = vmatpush1.msra.mxu0 0.0
    %426 = vmatprep.subr.mxu0 0.0
    %427 = vmatpush1.msra.mxu0 0.0
    %428 = vmatprep.subr.mxu0 0.0
    %429 = vmatpush1.msra.mxu0 0.0
    %430 = vmatprep.subr.mxu0 0.0
    %431 = vmatpush1.msra.mxu0 0.0
    %432 = vmatprep.subr.mxu0 0.0
    %433 = vmatpush1.msra.mxu0 0.0
    %434 = vmatprep.mubr.f32.mxu0 0.0
    %v435 = vand.u32 %v29, 4294901760
    %436 = vmatmul.mubr.f32.gmra.mrb[0].mxu0 %v435
    %v437 = vpop.f32.mrb[0].mxu0
    %v438 = vadd.f32 %v355, %v437
    %v439 = vpop.f32.mrb[0].mxu0
    %440 = vdwg.mxu0
    %441 = vmatprep.subr.mxu0 0.0
    %v442 = vand.u32 %v16, 4294901760
    %443 = vmatpush1.msra.mxu0 %v442
    %444 = vmatprep.subr.mxu0 0.0
    %v445 = vand.u32 %v17, 4294901760
    %446 = vmatpush1.msra.mxu0 %v445
    %447 = vmatprep.subr.mxu0 0.0
    %v448 = vand.u32 %v18, 4294901760
    %449 = vmatpush1.msra.mxu0 %v448
    %450 = vmatprep.subr.mxu0 0.0
    %v451 = vand.u32 %v19, 4294901760
    %452 = vmatpush1.msra.mxu0 %v451
    %453 = vmatprep.subr.mxu0 0.0
    %454 = vmatpush1.msra.mxu0 0.0
    %455 = vmatprep.subr.mxu0 0.0
    %456 = vmatpush1.msra.mxu0 0.0
    %457 = vmatprep.subr.mxu0 0.0
    %458 = vmatpush1.msra.mxu0 0.0
    %459 = vmatprep.subr.mxu0 0.0
    %460 = vmatpush1.msra.mxu0 0.0
    %461 = vmatprep.subr.mxu0 0.0
    %462 = vmatpush1.msra.mxu0 0.0
    %463 = vmatprep.subr.mxu0 0.0
    %464 = vmatpush1.msra.mxu0 0.0
    %465 = vmatprep.subr.mxu0 0.0
    %466 = vmatpush1.msra.mxu0 0.0
    %467 = vmatprep.subr.mxu0 0.0
    %468 = vmatpush1.msra.mxu0 0.0
    %469 = vmatprep.subr.mxu0 0.0
    %470 = vmatpush1.msra.mxu0 0.0
    %471 = vmatprep.subr.mxu0 0.0
    %472 = vmatpush1.msra.mxu0 0.0
    %473 = vmatprep.subr.mxu0 0.0
    %474 = vmatpush1.msra.mxu0 0.0
    %475 = vmatprep.subr.mxu0 0.0
    %476 = vmatpush1.msra.mxu0 0.0
    %477 = vmatprep.subr.mxu0 0.0
    %478 = vmatpush1.msra.mxu0 0.0
    %479 = vmatprep.subr.mxu0 0.0
    %480 = vmatpush1.msra.mxu0 0.0
    %481 = vmatprep.subr.mxu0 0.0
    %482 = vmatpush1.msra.mxu0 0.0
    %483 = vmatprep.subr.mxu0 0.0
    %484 = vmatpush1.msra.mxu0 0.0
    %485 = vmatprep.subr.mxu0 0.0
    %486 = vmatpush1.msra.mxu0 0.0
    %487 = vmatprep.subr.mxu0 0.0
    %488 = vmatpush1.msra.mxu0 0.0
    %489 = vmatprep.subr.mxu0 0.0
    %490 = vmatpush1.msra.mxu0 0.0
    %491 = vmatprep.subr.mxu0 0.0
    %492 = vmatpush1.msra.mxu0 0.0
    %493 = vmatprep.subr.mxu0 0.0
    %494 = vmatpush1.msra.mxu0 0.0
    %495 = vmatprep.subr.mxu0 0.0
    %496 = vmatpush1.msra.mxu0 0.0
    %497 = vmatprep.subr.mxu0 0.0
    %498 = vmatpush1.msra.mxu0 0.0
    %499 = vmatprep.subr.mxu0 0.0
    %500 = vmatpush1.msra.mxu0 0.0
    %501 = vmatprep.subr.mxu0 0.0
    %502 = vmatpush1.msra.mxu0 0.0
    %503 = vmatprep.subr.mxu0 0.0
    %504 = vmatpush1.msra.mxu0 0.0
    %505 = vmatprep.subr.mxu0 0.0
    %506 = vmatpush1.msra.mxu0 0.0
    %507 = vmatprep.subr.mxu0 0.0
    %508 = vmatpush1.msra.mxu0 0.0
    %509 = vmatprep.mubr.f32.mxu0 0.0
    %v510 = vand.u32 %v29, 4294901760
    %511 = vmatmul.mubr.f32.gmra.mrb[0].mxu0 %v510
    %v512 = vpop.f32.mrb[0].mxu0
    %v513 = vadd.f32 %v438, %v512
    %v514 = vpop.f32.mrb[0].mxu0
    %515 = vdwg.mxu0
    %vm516 = vcmask 130048
    %v517 = vsel %vm516, %v513, -inf
    %v518 = vrot.slane %v517, 4
    %v519 = vmax.f32 %v517, %v518
    %v520 = vrot.slane %v519, 2
    %v521 = vmax.f32 %v519, %v520
    %v522 = vrot.slane %v521, 1
    %v523 = vmax.f32 %v521, %v522
    %v524 = vsub.f32 %v513, %v523
    %v525 = vmul.f32 %v524, 1.442695
    %v526 = vpow.pop %v525
    %v527 = vsel %vm516, %v526, 0.0
    %v528 = vrot.slane %v527, 4
    %v529 = vadd.f32 %v527, %v528
    %v530 = vrot.slane %v529, 2
    %v531 = vadd.f32 %v529, %v530
    %v532 = vrot.slane %v531, 1
    %v533 = vadd.f32 %v531, %v532
    %v534 = vrcp.pop %v533
    %v535 = vmul.f32 %v526, %v534
    %536 = vst.msk [vmem:[#allocation2] sm:$0xff] %vm516, %v535
    // Predicated region
    $region14: #{tpu_custom_call.1} parent=1 // pred_check
      _
    $region15: #{tpu_custom_call.1} parent=1 // pred_check_branch
      %538 = sbr.rel (0) target = $region17
    $region16: #{tpu_custom_call.1} parent=1 // pred_region
      %s540 = ssub.s32 128, 128
      %541 = vsyncadd [#allocation3], %s540
      %s543 = sshll.u32 [#allocation2], 4
      %s544 = int_to_ptr.vmem [resolvable:$true] %s543
      %546 = dma.vmem_to_hbm [thread:$0]  %s544, 128, %s3, [#allocation3]
    $region17: #{tpu_custom_call.1} parent=1 // pred_fallthru
      _
    // Predicated region
    $region18: #{tpu_custom_call.1} parent=1 // pred_check
      _
    $region19: #{tpu_custom_call.1} parent=1 // pred_check_branch
      %548 = sbr.rel (0) target = $region21
    $region20: #{tpu_custom_call.1} parent=1 // pred_region
      %549 = dma.done [#allocation3], 128
    $region21: #{tpu_custom_call.1} parent=1 // pred_fallthru
      _
    %550 = vsyncpa [#allocation3], 1

</llo_original>
